<compile_context>
chip_gen: v7x
topology: tpu7x:2x2x1
jax: 0.10.0
libtpu: 0.0.40
codegen_flags: <defaults>
</compile_context>

<pallas_src>
import functools

import numpy as np

import jax
import jax.numpy as jnp
from jax.experimental import pallas as pl
from jax.experimental.pallas import tpu as pltpu


# ------------------------------------------------------------------
# Morlet wavelet + CWT filter-bank construction (host-side, numpy).
# ------------------------------------------------------------------
class Morlet:
    def __init__(self, w0=6.0):
        self.w0 = float(w0)

    def __call__(self, t, s=1.0, complete=True):
        w = self.w0
        x = t / s
        out = np.exp(1j * w * x)
        if complete:
            out = out - np.exp(-0.5 * w ** 2)
        out = out * np.exp(-0.5 * x ** 2) * np.pi ** (-0.25)
        return out

    def fourier_period(self, s):
        return 4.0 * np.pi * s / (self.w0 + (2.0 + self.w0 ** 2) ** 0.5)


def compute_minimum_scale(wavelet, dt):
    # Closed-form solution of fourier_period(s) == 2*dt (module uses scipy fsolve).
    return 2.0 * dt * (wavelet.w0 + (2.0 + wavelet.w0 ** 2) ** 0.5) / (4.0 * np.pi)


def compute_optimal_scales(wavelet, dt, dj, signal_length, fmin, fmax):
    s0 = compute_minimum_scale(wavelet, dt)
    J = int(1.0 / dj * np.log2(signal_length * dt / s0))
    scales = s0 * 2.0 ** (dj * np.arange(0, J + 1))
    freqs = np.array([1.0 / wavelet.fourier_period(s) for s in scales])
    if fmin:
        freqs_kept = freqs[freqs >= fmin]
        scales = scales[0:len(freqs_kept)]
        freqs = freqs_kept
    if fmax:
        freqs_kept = freqs[freqs <= fmax]
        scales = scales[len(scales) - len(freqs_kept):len(scales)]
    return scales


def build_wavelet_bank(wavelet, scales, dt):
    """Returns (W, L) complex128 bank: conj(flip(filter)) per scale, zero-padded."""
    filters = []
    for s in scales:
        M = 10.0 * s / dt
        t = np.arange((-M + 1) / 2.0, (M + 1) / 2.0) * dt
        if len(t) % 2 == 0:
            t = t[0:-1]
        norm = (dt / s) ** 0.5
        filt = norm * wavelet(t, s)
        filters.append(np.conj(filt[::-1]))
    filter_len = filters[-1].shape[0]          # longest (largest scale) filter, odd
    padded = []
    for f in filters:
        p = (filter_len - f.shape[0]) // 2
        padded.append(np.pad(f, (p, p)))
    return np.stack(padded)                    # (W, L)


def _round_up(v, m):
    return (v + m - 1) // m * m


# ------------------------------------------------------------------
# Pallas kernel.
# ------------------------------------------------------------------
def _cwt_kernel(xs_ref, bank_ref, out_ref, xcol_ref, acc_ref):
    """One grid step: NB (batch*channel) rows x one T-tile -> (NB, W, TT) magnitude.

    xs_ref   : (NB, NPH, MLEN) cdt  NPH-phase replicated padded signals:
                                    xs[n, r, m] == x_pad[n, r + m]
    bank_ref : (NC, 2*W8, Lc)  cdt  fused [real ; imag] wavelet bank, K-chunked
    out_ref  : (NB, W, TT)     odt  CWT magnitude for this T-tile
    xcol_ref : (Lc, NB*TT)     cdt  scratch: im2col chunk for all NB rows
    acc_ref  : (2*W8, NB*TT)   f32  matmul accumulator
    """
    NB, NPH, _ = xs_ref.shape
    NC, W2pad, Lc = bank_ref.shape
    W8 = W2pad // 2
    W, TT = out_ref.shape[1], out_ref.shape[2]
    n_slabs = Lc // NPH

    t_base = pl.program_id(1) * TT             # lane offset of this T-tile

    for c in range(NC):                        # static K-chunk loop (NC is small)
        # Build the (Lc, NB*TT) im2col chunk with dense, 128-lane-aligned
        # (NPH, TT) loads + stores (all offsets are multiples of 128).
        for g in range(n_slabs):
            row0 = g * NPH
            for n in range(NB):
                off = pl.multiple_of(c * Lc + row0 + t_base, 128)
                slab = xs_ref[n, :, pl.ds(off, TT)]             # (NPH, TT) aligned load
                xcol_ref[row0:row0 + NPH, n * TT:(n + 1) * TT] = (
                    slab.astype(xcol_ref.dtype))                # (NPH, TT) aligned store

        # Fused real+imag bank matmul for this chunk, f32 accumulation.
        prod = jnp.dot(bank_ref[c], xcol_ref[...],
                       preferred_element_type=jnp.float32)
        if c == 0:
            acc_ref[...] = prod                # first chunk: direct write (no zero fill)
        else:
            acc_ref[...] += prod

    # Magnitude epilogue in f32.
    for n in range(NB):
        re = acc_ref[0:W, n * TT:(n + 1) * TT]
        im = acc_ref[W8:W8 + W, n * TT:(n + 1) * TT]
        out_ref[n] = jnp.sqrt(re * re + im * im).astype(out_ref.dtype)


@functools.partial(
    jax.jit,
    static_argnames=("compute_dtype", "out_dtype", "lc_max", "tt_max", "n_target"))
def cwt_pallas(x, kernel_real, kernel_imag, *, compute_dtype=jnp.bfloat16,
               out_dtype=jnp.float32, lc_max=1024, tt_max=1024, n_target=2048):
    """x: (B, C, T) f32; kernel_*: (W, L) f32 (L odd). Returns (B, C, W, T) out_dtype."""
    B, C, T = x.shape
    W, L = kernel_real.shape
    pad = (L - 1) // 2                         # conv2d_same, stride 1, odd kernel
    BC = B * C
    NPH = 128                                  # phase count -> 128-aligned lane offsets

    # ---- T tiling (lane axis): TT | T_pad, TT a multiple of 128, TT <= tt_max.
    T_pad = _round_up(T, 128)
    tt_cap = max(128, min(_round_up(tt_max, 128), T_pad))
    TT = 128
    for d in range(tt_cap // 128, 0, -1):
        if (T_pad // 128) % d == 0:
            TT = 128 * d
            break

    # ---- rows per grid step: keep the MXU N dimension ~n_target wide.
    NB = max(1, min(n_target // TT, BC, 16))
    BC_pad = _round_up(BC, NB)

    # ---- filter-length (K) chunking.
    W8 = _round_up(W, 8)                       # sublane-align real / imag halves
    # TODO(synk): for best MXU utilization choose dj so 2*W8 lands at/just below a
    # multiple of 256 (128 on v5e); W here follows the module's scale rule.
    lc_cap = max(NPH, _round_up(lc_max, NPH))
    L_round = _round_up(L, NPH)
    num_chunks = -(-L_round // lc_cap)
    Lc = _round_up(-(-L_round // num_chunks), NPH)
    L_total = num_chunks * Lc

    # ---- lane extents.
    MLEN = L_total - NPH + T_pad               # multiple of 128 by construction
    P = MLEN + NPH                             # padded-signal length

    # ---- fused + K-chunked wavelet bank: rows [0, W) real, [W8, W8+W) imag.
    bank2 = jnp.zeros((2 * W8, L_total), jnp.float32)
    bank2 = bank2.at[0:W, 0:L].set(jnp.asarray(kernel_real, jnp.float32))
    bank2 = bank2.at[W8:W8 + W, 0:L].set(jnp.asarray(kernel_imag, jnp.float32))
    bank3 = (bank2.reshape(2 * W8, num_chunks, Lc)
             .transpose(1, 0, 2).astype(compute_dtype))       # (NC, 2*W8, Lc)

    # ---- NPH-phase replicated, zero-padded signal: xs[n, r, m] = x_pad[n, r + m].
    # TODO(synk): if input HBM traffic ever dominates (kernel currently stays
    # MXU-bound), pass the raw padded signal via memory_space=pl.ANY and build the
    # phases in-kernel instead of host-side replication.
    x2 = x.reshape(BC, T).astype(jnp.float32)
    if BC_pad != BC:
        x2 = jnp.pad(x2, ((0, BC_pad - BC), (0, 0)))
    xp = jnp.pad(x2, ((0, 0), (pad, P - T - pad))).astype(compute_dtype)
    xs = jnp.stack([xp[:, r:r + MLEN] for r in range(NPH)], axis=1)  # (BC_pad, NPH, MLEN)

    # ---- VMEM budget (double-buffered blocks + scratch) -> scoped limit.
    idt = jnp.dtype(compute_dtype).itemsize
    odt = jnp.dtype(out_dtype).itemsize
    vmem_est = (2 * NB * NPH * MLEN * idt              # xs blocks (double-buffered)
                + 2 * num_chunks * 2 * W8 * Lc * idt   # bank blocks
                + 2 * NB * W * TT * odt                # out blocks
                + Lc * NB * TT * idt                   # im2col scratch
                + 2 * W8 * NB * TT * 4)                # f32 accumulator
    vmem_limit = int(min(max(vmem_est * 5 // 4 + (8 << 20), 32 << 20), 96 << 20))

    grid = (BC_pad // NB, T_pad // TT)                 # T-tiles iterate fastest
    out = pl.pallas_call(
        _cwt_kernel,
        out_shape=jax.ShapeDtypeStruct((BC_pad, W, T_pad), out_dtype),
        grid_spec=pltpu.PrefetchScalarGridSpec(
            num_scalar_prefetch=0,
            grid=grid,
            in_specs=[
                # Full phase plane per row block; block index is j-invariant, so it
                # is DMA'd once and re-used across all T-tiles of the same rows.
                pl.BlockSpec((NB, NPH, MLEN), lambda i, j: (i, 0, 0)),
                # Invariant bank; fetched once for the whole grid.
                pl.BlockSpec((num_chunks, 2 * W8, Lc), lambda i, j: (0, 0, 0)),
            ],
            out_specs=pl.BlockSpec((NB, W, TT), lambda i, j: (i, 0, j)),
            scratch_shapes=[
                pltpu.VMEM((Lc, NB * TT), compute_dtype),      # im2col chunk
                pltpu.VMEM((2 * W8, NB * TT), jnp.float32),    # f32 accumulator
            ],
        ),
        compiler_params=pltpu.CompilerParams(
            dimension_semantics=("parallel", "parallel"),
            vmem_limit_bytes=vmem_limit),
    )(xs, bank3)

    return out[:BC, :, :T].reshape(B, C, W, T)


# ------------------------------------------------------------------
# Pure-numpy reference (mirrors the PyTorch forward pass).
# ------------------------------------------------------------------
def cwt_reference(x, kernel_real, kernel_imag):
    B, C, T = x.shape
    W, L = kernel_real.shape
    pad = (L - 1) // 2
    xp = np.pad(x, ((0, 0), (0, 0), (pad, pad)))
    out = np.zeros((B, C, W, T), dtype=np.float64)
    for b in range(B):
        for c in range(C):
            for w in range(W):
                r = np.correlate(xp[b, c], kernel_real[w], mode="valid")
                i = np.correlate(xp[b, c], kernel_imag[w], mode="valid")
                out[b, c, w] = np.sqrt(r * r + i * i)
    return out


if __name__ == "__main__":
    # Small, self-consistent configuration (scaled-down version of the g2net
    # defaults dt=1/2048, fmin=20, fmax=500 so the filter bank stays tiny).
    B, C, T = 2, 3, 128
    dt, dj, fmin, fmax = 1.0 / 64.0, 0.125, 5, 15

    wavelet = Morlet(w0=6.0)
    scales = compute_optimal_scales(wavelet, dt, dj, signal_length=T,
                                    fmin=fmin, fmax=fmax)
    bank = build_wavelet_bank(wavelet, scales, dt)            # (W, L) complex
    kr = jnp.asarray(np.real(bank), dtype=jnp.float32)
    ki = jnp.asarray(np.imag(bank), dtype=jnp.float32)

    key = jax.random.PRNGKey(0)
    x = jax.random.normal(key, (B, C, T), dtype=jnp.float32)

    ref = cwt_reference(np.asarray(x, dtype=np.float64),
                        np.asarray(kr, dtype=np.float64),
                        np.asarray(ki, dtype=np.float64))

    # float32-operand path (tighter check; MXU still accumulates in f32).
    out_f32 = jax.block_until_ready(
        cwt_pallas(x, kr, ki, compute_dtype=jnp.float32))
    np.testing.assert_allclose(np.asarray(out_f32), ref, rtol=2e-2, atol=2e-2)

    # bfloat16-operand / float32-accumulate path (default, MXU-native).
    out_bf16 = jax.block_until_ready(
        cwt_pallas(x, kr, ki, compute_dtype=jnp.bfloat16))
    np.testing.assert_allclose(np.asarray(out_bf16), ref, rtol=6e-2, atol=6e-2)

    print("KERNEL_OK")
</pallas_src>

<mosaic_0001>
module attributes {stable_mosaic.version = 11 : i64} {
  func.func @_cwt_kernel(%arg0: i32, %arg1: i32, %arg2: memref<6x128x128xf32, #tpu.memory_space<vmem>>, %arg3: memref<1x32x128xf32, #tpu.memory_space<vmem>>, %arg4: memref<6x13x128xf32, #tpu.memory_space<vmem>>, %arg5: memref<128x768xf32, #tpu.memory_space<vmem>>, %arg6: memref<32x768xf32, #tpu.memory_space<vmem>>) attributes {dimension_semantics = [#tpu.dimension_semantics<parallel>, #tpu.dimension_semantics<parallel>], iteration_bounds = array<i64: 1, 1>, scalar_prefetch = 0 : i64, scratch_operands = 2 : i64, tpu.core_type = #tpu.core_type<tc>, window_params = [{transform_indices = @transform_0, window_bounds = array<i64: 6, 128, 128>}, {pipeline_mode = #tpu.pipeline_mode<synchronous>, transform_indices = @transform_1, window_bounds = array<i64: 1, 32, 128>}, {transform_indices = @transform_2, window_bounds = array<i64: 6, 13, 128>}]} {
    %c128_i32 = arith.constant 128 : i32
    %0 = arith.muli %arg1, %c128_i32 : i32
    %c0_i32 = arith.constant 0 : i32
    %1 = arith.addi %c0_i32, %0 : i32
    %2 = tpu.assume_multiple %1, 128 : i32
    %c0 = arith.constant 0 : index
    %c0_0 = arith.constant 0 : index
    %3 = arith.index_cast %2 : i32 to index
    %4 = vector.load %arg2[%c0, %c0_0, %3] : memref<6x128x128xf32, #tpu.memory_space<vmem>>, vector<1x128x128xf32>
    %5 = vector.shape_cast %4 : vector<1x128x128xf32> to vector<128x128xf32>
    %c0_1 = arith.constant 0 : index
    %c0_2 = arith.constant 0 : index
    %6 = vector.load %arg5[%c0_1, %c0_2] : memref<128x768xf32, #tpu.memory_space<vmem>>, vector<128x128xf32>
    tpu.vector_store %arg5[%c0_1, %c0_2], %5 {strides = array<i32>} : memref<128x768xf32, #tpu.memory_space<vmem>>, vector<128x128xf32>,
    %c0_i32_3 = arith.constant 0 : i32
    %7 = arith.addi %c0_i32_3, %0 : i32
    %8 = tpu.assume_multiple %7, 128 : i32
    %c1 = arith.constant 1 : index
    %c0_4 = arith.constant 0 : index
    %9 = arith.index_cast %8 : i32 to index
    %10 = vector.load %arg2[%c1, %c0_4, %9] : memref<6x128x128xf32, #tpu.memory_space<vmem>>, vector<1x128x128xf32>
    %11 = vector.shape_cast %10 : vector<1x128x128xf32> to vector<128x128xf32>
    %c0_5 = arith.constant 0 : index
    %c128 = arith.constant 128 : index
    %12 = vector.load %arg5[%c0_5, %c128] : memref<128x768xf32, #tpu.memory_space<vmem>>, vector<128x128xf32>
    tpu.vector_store %arg5[%c0_5, %c128], %11 {strides = array<i32>} : memref<128x768xf32, #tpu.memory_space<vmem>>, vector<128x128xf32>,
    %c0_i32_6 = arith.constant 0 : i32
    %13 = arith.addi %c0_i32_6, %0 : i32
    %14 = tpu.assume_multiple %13, 128 : i32
    %c2 = arith.constant 2 : index
    %c0_7 = arith.constant 0 : index
    %15 = arith.index_cast %14 : i32 to index
    %16 = vector.load %arg2[%c2, %c0_7, %15] : memref<6x128x128xf32, #tpu.memory_space<vmem>>, vector<1x128x128xf32>
    %17 = vector.shape_cast %16 : vector<1x128x128xf32> to vector<128x128xf32>
    %c0_8 = arith.constant 0 : index
    %c256 = arith.constant 256 : index
    %18 = vector.load %arg5[%c0_8, %c256] : memref<128x768xf32, #tpu.memory_space<vmem>>, vector<128x128xf32>
    tpu.vector_store %arg5[%c0_8, %c256], %17 {strides = array<i32>} : memref<128x768xf32, #tpu.memory_space<vmem>>, vector<128x128xf32>,
    %c0_i32_9 = arith.constant 0 : i32
    %19 = arith.addi %c0_i32_9, %0 : i32
    %20 = tpu.assume_multiple %19, 128 : i32
    %c3 = arith.constant 3 : index
    %c0_10 = arith.constant 0 : index
    %21 = arith.index_cast %20 : i32 to index
    %22 = vector.load %arg2[%c3, %c0_10, %21] : memref<6x128x128xf32, #tpu.memory_space<vmem>>, vector<1x128x128xf32>
    %23 = vector.shape_cast %22 : vector<1x128x128xf32> to vector<128x128xf32>
    %c0_11 = arith.constant 0 : index
    %c384 = arith.constant 384 : index
    %24 = vector.load %arg5[%c0_11, %c384] : memref<128x768xf32, #tpu.memory_space<vmem>>, vector<128x128xf32>
    tpu.vector_store %arg5[%c0_11, %c384], %23 {strides = array<i32>} : memref<128x768xf32, #tpu.memory_space<vmem>>, vector<128x128xf32>,
    %c0_i32_12 = arith.constant 0 : i32
    %25 = arith.addi %c0_i32_12, %0 : i32
    %26 = tpu.assume_multiple %25, 128 : i32
    %c4 = arith.constant 4 : index
    %c0_13 = arith.constant 0 : index
    %27 = arith.index_cast %26 : i32 to index
    %28 = vector.load %arg2[%c4, %c0_13, %27] : memref<6x128x128xf32, #tpu.memory_space<vmem>>, vector<1x128x128xf32>
    %29 = vector.shape_cast %28 : vector<1x128x128xf32> to vector<128x128xf32>
    %c0_14 = arith.constant 0 : index
    %c512 = arith.constant 512 : index
    %30 = vector.load %arg5[%c0_14, %c512] : memref<128x768xf32, #tpu.memory_space<vmem>>, vector<128x128xf32>
    tpu.vector_store %arg5[%c0_14, %c512], %29 {strides = array<i32>} : memref<128x768xf32, #tpu.memory_space<vmem>>, vector<128x128xf32>,
    %c0_i32_15 = arith.constant 0 : i32
    %31 = arith.addi %c0_i32_15, %0 : i32
    %32 = tpu.assume_multiple %31, 128 : i32
    %c5 = arith.constant 5 : index
    %c0_16 = arith.constant 0 : index
    %33 = arith.index_cast %32 : i32 to index
    %34 = vector.load %arg2[%c5, %c0_16, %33] : memref<6x128x128xf32, #tpu.memory_space<vmem>>, vector<1x128x128xf32>
    %35 = vector.shape_cast %34 : vector<1x128x128xf32> to vector<128x128xf32>
    %c0_17 = arith.constant 0 : index
    %c640 = arith.constant 640 : index
    %36 = vector.load %arg5[%c0_17, %c640] : memref<128x768xf32, #tpu.memory_space<vmem>>, vector<128x128xf32>
    tpu.vector_store %arg5[%c0_17, %c640], %35 {strides = array<i32>} : memref<128x768xf32, #tpu.memory_space<vmem>>, vector<128x128xf32>,
    %c0_18 = arith.constant 0 : index
    %c0_19 = arith.constant 0 : index
    %c0_20 = arith.constant 0 : index
    %37 = vector.load %arg3[%c0_18, %c0_19, %c0_20] : memref<1x32x128xf32, #tpu.memory_space<vmem>>, vector<1x32x128xf32>
    %38 = vector.shape_cast %37 : vector<1x32x128xf32> to vector<32x128xf32>
    %c0_21 = arith.constant 0 : index
    %c0_22 = arith.constant 0 : index
    %39 = vector.load %arg5[%c0_21, %c0_22] : memref<128x768xf32, #tpu.memory_space<vmem>>, vector<128x768xf32>
    %cst = arith.constant dense<0.000000e+00> : vector<32x768xf32>
    %40 = tpu.matmul %38, %39, %cst {dimension_numbers = #tpu.dot_dimension_numbers<[1], [0], [0], [1], [0, 0, 1, 1], [], []>} : vector<32x128xf32>, vector<128x768xf32>, vector<32x768xf32> -> vector<32x768xf32>
    %c0_23 = arith.constant 0 : index
    %c0_24 = arith.constant 0 : index
    %41 = vector.load %arg6[%c0_23, %c0_24] : memref<32x768xf32, #tpu.memory_space<vmem>>, vector<32x768xf32>
    tpu.vector_store %arg6[%c0_23, %c0_24], %40 {strides = array<i32>} : memref<32x768xf32, #tpu.memory_space<vmem>>, vector<32x768xf32>,
    %c0_25 = arith.constant 0 : index
    %c0_26 = arith.constant 0 : index
    %42 = vector.load %arg6[%c0_25, %c0_26] : memref<32x768xf32, #tpu.memory_space<vmem>>, vector<13x128xf32>
    %c16 = arith.constant 16 : index
    %c0_27 = arith.constant 0 : index
    %43 = vector.load %arg6[%c16, %c0_27] : memref<32x768xf32, #tpu.memory_space<vmem>>, vector<13x128xf32>
    %44 = arith.mulf %42, %42 : vector<13x128xf32>
    %45 = arith.mulf %43, %43 : vector<13x128xf32>
    %46 = arith.addf %44, %45 : vector<13x128xf32>
    %47 = math.sqrt %46 : vector<13x128xf32>
    %c0_28 = arith.constant 0 : index
    %c0_29 = arith.constant 0 : index
    %c0_30 = arith.constant 0 : index
    %48 = vector.load %arg4[%c0_28, %c0_29, %c0_30] : memref<6x13x128xf32, #tpu.memory_space<vmem>>, vector<1x13x128xf32>
    %49 = vector.shape_cast %48 : vector<1x13x128xf32> to vector<13x128xf32>
    %50 = vector.shape_cast %47 : vector<13x128xf32> to vector<1x13x128xf32>
    tpu.vector_store %arg4[%c0_28, %c0_29, %c0_30], %50 {strides = array<i32>} : memref<6x13x128xf32, #tpu.memory_space<vmem>>, vector<1x13x128xf32>,
    %c0_31 = arith.constant 0 : index
    %c128_32 = arith.constant 128 : index
    %51 = vector.load %arg6[%c0_31, %c128_32] : memref<32x768xf32, #tpu.memory_space<vmem>>, vector<13x128xf32>
    %c16_33 = arith.constant 16 : index
    %c128_34 = arith.constant 128 : index
    %52 = vector.load %arg6[%c16_33, %c128_34] : memref<32x768xf32, #tpu.memory_space<vmem>>, vector<13x128xf32>
    %53 = arith.mulf %51, %51 : vector<13x128xf32>
    %54 = arith.mulf %52, %52 : vector<13x128xf32>
    %55 = arith.addf %53, %54 : vector<13x128xf32>
    %56 = math.sqrt %55 : vector<13x128xf32>
    %c1_35 = arith.constant 1 : index
    %c0_36 = arith.constant 0 : index
    %c0_37 = arith.constant 0 : index
    %57 = vector.load %arg4[%c1_35, %c0_36, %c0_37] : memref<6x13x128xf32, #tpu.memory_space<vmem>>, vector<1x13x128xf32>
    %58 = vector.shape_cast %57 : vector<1x13x128xf32> to vector<13x128xf32>
    %59 = vector.shape_cast %56 : vector<13x128xf32> to vector<1x13x128xf32>
    tpu.vector_store %arg4[%c1_35, %c0_36, %c0_37], %59 {strides = array<i32>} : memref<6x13x128xf32, #tpu.memory_space<vmem>>, vector<1x13x128xf32>,
    %c0_38 = arith.constant 0 : index
    %c256_39 = arith.constant 256 : index
    %60 = vector.load %arg6[%c0_38, %c256_39] : memref<32x768xf32, #tpu.memory_space<vmem>>, vector<13x128xf32>
    %c16_40 = arith.constant 16 : index
    %c256_41 = arith.constant 256 : index
    %61 = vector.load %arg6[%c16_40, %c256_41] : memref<32x768xf32, #tpu.memory_space<vmem>>, vector<13x128xf32>
    %62 = arith.mulf %60, %60 : vector<13x128xf32>
    %63 = arith.mulf %61, %61 : vector<13x128xf32>
    %64 = arith.addf %62, %63 : vector<13x128xf32>
    %65 = math.sqrt %64 : vector<13x128xf32>
    %c2_42 = arith.constant 2 : index
    %c0_43 = arith.constant 0 : index
    %c0_44 = arith.constant 0 : index
    %66 = vector.load %arg4[%c2_42, %c0_43, %c0_44] : memref<6x13x128xf32, #tpu.memory_space<vmem>>, vector<1x13x128xf32>
    %67 = vector.shape_cast %66 : vector<1x13x128xf32> to vector<13x128xf32>
    %68 = vector.shape_cast %65 : vector<13x128xf32> to vector<1x13x128xf32>
    tpu.vector_store %arg4[%c2_42, %c0_43, %c0_44], %68 {strides = array<i32>} : memref<6x13x128xf32, #tpu.memory_space<vmem>>, vector<1x13x128xf32>,
    %c0_45 = arith.constant 0 : index
    %c384_46 = arith.constant 384 : index
    %69 = vector.load %arg6[%c0_45, %c384_46] : memref<32x768xf32, #tpu.memory_space<vmem>>, vector<13x128xf32>
    %c16_47 = arith.constant 16 : index
    %c384_48 = arith.constant 384 : index
    %70 = vector.load %arg6[%c16_47, %c384_48] : memref<32x768xf32, #tpu.memory_space<vmem>>, vector<13x128xf32>
    %71 = arith.mulf %69, %69 : vector<13x128xf32>
    %72 = arith.mulf %70, %70 : vector<13x128xf32>
    %73 = arith.addf %71, %72 : vector<13x128xf32>
    %74 = math.sqrt %73 : vector<13x128xf32>
    %c3_49 = arith.constant 3 : index
    %c0_50 = arith.constant 0 : index
    %c0_51 = arith.constant 0 : index
    %75 = vector.load %arg4[%c3_49, %c0_50, %c0_51] : memref<6x13x128xf32, #tpu.memory_space<vmem>>, vector<1x13x128xf32>
    %76 = vector.shape_cast %75 : vector<1x13x128xf32> to vector<13x128xf32>
    %77 = vector.shape_cast %74 : vector<13x128xf32> to vector<1x13x128xf32>
    tpu.vector_store %arg4[%c3_49, %c0_50, %c0_51], %77 {strides = array<i32>} : memref<6x13x128xf32, #tpu.memory_space<vmem>>, vector<1x13x128xf32>,
    %c0_52 = arith.constant 0 : index
    %c512_53 = arith.constant 512 : index
    %78 = vector.load %arg6[%c0_52, %c512_53] : memref<32x768xf32, #tpu.memory_space<vmem>>, vector<13x128xf32>
    %c16_54 = arith.constant 16 : index
    %c512_55 = arith.constant 512 : index
    %79 = vector.load %arg6[%c16_54, %c512_55] : memref<32x768xf32, #tpu.memory_space<vmem>>, vector<13x128xf32>
    %80 = arith.mulf %78, %78 : vector<13x128xf32>
    %81 = arith.mulf %79, %79 : vector<13x128xf32>
    %82 = arith.addf %80, %81 : vector<13x128xf32>
    %83 = math.sqrt %82 : vector<13x128xf32>
    %c4_56 = arith.constant 4 : index
    %c0_57 = arith.constant 0 : index
    %c0_58 = arith.constant 0 : index
    %84 = vector.load %arg4[%c4_56, %c0_57, %c0_58] : memref<6x13x128xf32, #tpu.memory_space<vmem>>, vector<1x13x128xf32>
    %85 = vector.shape_cast %84 : vector<1x13x128xf32> to vector<13x128xf32>
    %86 = vector.shape_cast %83 : vector<13x128xf32> to vector<1x13x128xf32>
    tpu.vector_store %arg4[%c4_56, %c0_57, %c0_58], %86 {strides = array<i32>} : memref<6x13x128xf32, #tpu.memory_space<vmem>>, vector<1x13x128xf32>,
    %c0_59 = arith.constant 0 : index
    %c640_60 = arith.constant 640 : index
    %87 = vector.load %arg6[%c0_59, %c640_60] : memref<32x768xf32, #tpu.memory_space<vmem>>, vector<13x128xf32>
    %c16_61 = arith.constant 16 : index
    %c640_62 = arith.constant 640 : index
    %88 = vector.load %arg6[%c16_61, %c640_62] : memref<32x768xf32, #tpu.memory_space<vmem>>, vector<13x128xf32>
    %89 = arith.mulf %87, %87 : vector<13x128xf32>
    %90 = arith.mulf %88, %88 : vector<13x128xf32>
    %91 = arith.addf %89, %90 : vector<13x128xf32>
    %92 = math.sqrt %91 : vector<13x128xf32>
    %c5_63 = arith.constant 5 : index
    %c0_64 = arith.constant 0 : index
    %c0_65 = arith.constant 0 : index
    %93 = vector.load %arg4[%c5_63, %c0_64, %c0_65] : memref<6x13x128xf32, #tpu.memory_space<vmem>>, vector<1x13x128xf32>
    %94 = vector.shape_cast %93 : vector<1x13x128xf32> to vector<13x128xf32>
    %95 = vector.shape_cast %92 : vector<13x128xf32> to vector<1x13x128xf32>
    tpu.vector_store %arg4[%c5_63, %c0_64, %c0_65], %95 {strides = array<i32>} : memref<6x13x128xf32, #tpu.memory_space<vmem>>, vector<1x13x128xf32>,
    return
  }
  func.func @transform_0(%arg0: i32, %arg1: i32) -> (i32, i32, i32) {
    %c0_i32 = arith.constant 0 : i32
    %c0_i32_0 = arith.constant 0 : i32
    %c0_i32_1 = arith.constant 0 : i32
    return %arg0, %c0_i32, %c0_i32_0 : i32, i32, i32
  }
  func.func @transform_1(%arg0: i32, %arg1: i32) -> (i32, i32, i32) {
    %c0_i32 = arith.constant 0 : i32
    %c0_i32_0 = arith.constant 0 : i32
    %c0_i32_1 = arith.constant 0 : i32
    %c0_i32_2 = arith.constant 0 : i32
    return %c0_i32, %c0_i32_0, %c0_i32_1 : i32, i32, i32
  }
  func.func @transform_2(%arg0: i32, %arg1: i32) -> (i32, i32, i32) {
    %c0_i32 = arith.constant 0 : i32
    %c0_i32_0 = arith.constant 0 : i32
    return %arg0, %c0_i32, %arg1 : i32, i32, i32
  }
}

</mosaic_0001>

<llo_original>
// kernel: cwt_pallas.1
$region0: #{cwt_pallas.1}
  #allocation0 [shape = 'u32[]', space=smem, size = 0x4, offset = 0x4, fixed_abs, tag = 'smem constant byte address 0x4 - core index']
  #allocation1 [shape = 'u32[144,128]{1,0:T(1,128)}', space=vmem, size = 0x12000, scoped, tag = 'internal scratch']
  #allocation2 [shape = 'f32[128,768]{1,0:T(8,128)}', space=vmem, size = 0x60000, scoped, tag = 'scratch operand']
  #allocation3 [shape = 'f32[32,768]{1,0:T(8,128)}', space=vmem, size = 0x18000, scoped, tag = 'scratch operand']
  %s0 = inlined_call_operand.vmem [shape: f32[6,128,128], index: 0, kind: input, shape index: {}]
  %s1 = inlined_call_operand.vmem [shape: f32[1,32,128], index: 1, kind: input, shape index: {}]
  %s2 = inlined_call_operand.vmem [shape: f32[6,13,128], index: 2, kind: output, shape index: {}]
  %s3 = sld [smem:[#allocation0]]
  $region18: #{cwt_pallas.1} parent=0
    _
  %s5 = ssub.s32 1, %s3
  %s6 = scalar_select 0, %s5, %s3
  // Predicated region
  $region2: #{cwt_pallas.1} parent=0 // pred_check
    _
  $region3: #{cwt_pallas.1} parent=0 // pred_check_branch
    %8 = sbr.rel (0) target = $region5
  $region4: #{cwt_pallas.1} parent=0 // pred_region
    _
  $region5: #{cwt_pallas.1} parent=0 // pred_fallthru
    _
  // Predicated region
  $region6: #{cwt_pallas.1} parent=0 // pred_check
    _
  $region7: #{cwt_pallas.1} parent=0 // pred_check_branch
    %10 = sbr.rel (0) target = $region9
  $region8: #{cwt_pallas.1} parent=0 // pred_region
    _
  $region9: #{cwt_pallas.1} parent=0 // pred_fallthru
    _
  %s11 = smul.u32 0, 128
  %s12 = sshra.s32 %s11, 7
  %s13 = sand.u32 %s11, 127
  %s14 = scalar_lea.vmem %s0, %s12
  %v15 = vld [vmem:[%s14] sm:$0xff]
  %v16 = vld [vmem:[%s14 + $0x8] sm:$0xff]
  %v17 = vld [vmem:[%s14 + $0x10] sm:$0xff]
  %v18 = vld [vmem:[%s14 + $0x18] sm:$0xff]
  %v19 = vld [vmem:[%s14 + $0x20] sm:$0xff]
  %v20 = vld [vmem:[%s14 + $0x28] sm:$0xff]
  %v21 = vld [vmem:[%s14 + $0x30] sm:$0xff]
  %v22 = vld [vmem:[%s14 + $0x38] sm:$0xff]
  %v23 = vld [vmem:[%s14 + $0x40] sm:$0xff]
  %v24 = vld [vmem:[%s14 + $0x48] sm:$0xff]
  %v25 = vld [vmem:[%s14 + $0x50] sm:$0xff]
  %v26 = vld [vmem:[%s14 + $0x58] sm:$0xff]
  %v27 = vld [vmem:[%s14 + $0x60] sm:$0xff]
  %v28 = vld [vmem:[%s14 + $0x68] sm:$0xff]
  %v29 = vld [vmem:[%s14 + $0x70] sm:$0xff]
  %v30 = vld [vmem:[%s14 + $0x78] sm:$0xff]
  %31 = vst [vmem:[#allocation2] sm:$0xff] %v15
  %32 = vst [vmem:[#allocation2 + $0x30] sm:$0xff] %v16
  %33 = vst [vmem:[#allocation2 + $0x60] sm:$0xff] %v17
  %34 = vst [vmem:[#allocation2 + $0x90] sm:$0xff] %v18
  %35 = vst [vmem:[#allocation2 + $0xc0] sm:$0xff] %v19
  %36 = vst [vmem:[#allocation2 + $0xf0] sm:$0xff] %v20
  %37 = vst [vmem:[#allocation2 + $0x120] sm:$0xff] %v21
  %38 = vst [vmem:[#allocation2 + $0x150] sm:$0xff] %v22
  %39 = vst [vmem:[#allocation2 + $0x180] sm:$0xff] %v23
  %40 = vst [vmem:[#allocation2 + $0x1b0] sm:$0xff] %v24
  %41 = vst [vmem:[#allocation2 + $0x1e0] sm:$0xff] %v25
  %42 = vst [vmem:[#allocation2 + $0x210] sm:$0xff] %v26
  %43 = vst [vmem:[#allocation2 + $0x240] sm:$0xff] %v27
  %44 = vst [vmem:[#allocation2 + $0x270] sm:$0xff] %v28
  %45 = vst [vmem:[#allocation2 + $0x2a0] sm:$0xff] %v29
  %46 = vst [vmem:[#allocation2 + $0x2d0] sm:$0xff] %v30
  %s47 = sadd.s32 %s12, 128
  %s48 = scalar_lea.vmem %s0, %s47
  %v49 = vld [vmem:[%s48] sm:$0xff]
  %v50 = vld [vmem:[%s48 + $0x8] sm:$0xff]
  %v51 = vld [vmem:[%s48 + $0x10] sm:$0xff]
  %v52 = vld [vmem:[%s48 + $0x18] sm:$0xff]
  %v53 = vld [vmem:[%s48 + $0x20] sm:$0xff]
  %v54 = vld [vmem:[%s48 + $0x28] sm:$0xff]
  %v55 = vld [vmem:[%s48 + $0x30] sm:$0xff]
  %v56 = vld [vmem:[%s48 + $0x38] sm:$0xff]
  %v57 = vld [vmem:[%s48 + $0x40] sm:$0xff]
  %v58 = vld [vmem:[%s48 + $0x48] sm:$0xff]
  %v59 = vld [vmem:[%s48 + $0x50] sm:$0xff]
  %v60 = vld [vmem:[%s48 + $0x58] sm:$0xff]
  %v61 = vld [vmem:[%s48 + $0x60] sm:$0xff]
  %v62 = vld [vmem:[%s48 + $0x68] sm:$0xff]
  %v63 = vld [vmem:[%s48 + $0x70] sm:$0xff]
  %v64 = vld [vmem:[%s48 + $0x78] sm:$0xff]
  %65 = vst [vmem:[#allocation2 + $0x8] sm:$0xff] %v49
  %66 = vst [vmem:[#allocation2 + $0x38] sm:$0xff] %v50
  %67 = vst [vmem:[#allocation2 + $0x68] sm:$0xff] %v51
  %68 = vst [vmem:[#allocation2 + $0x98] sm:$0xff] %v52
  %69 = vst [vmem:[#allocation2 + $0xc8] sm:$0xff] %v53
  %70 = vst [vmem:[#allocation2 + $0xf8] sm:$0xff] %v54
  %71 = vst [vmem:[#allocation2 + $0x128] sm:$0xff] %v55
  %72 = vst [vmem:[#allocation2 + $0x158] sm:$0xff] %v56
  %73 = vst [vmem:[#allocation2 + $0x188] sm:$0xff] %v57
  %74 = vst [vmem:[#allocation2 + $0x1b8] sm:$0xff] %v58
  %75 = vst [vmem:[#allocation2 + $0x1e8] sm:$0xff] %v59
  %76 = vst [vmem:[#allocation2 + $0x218] sm:$0xff] %v60
  %77 = vst [vmem:[#allocation2 + $0x248] sm:$0xff] %v61
  %78 = vst [vmem:[#allocation2 + $0x278] sm:$0xff] %v62
  %79 = vst [vmem:[#allocation2 + $0x2a8] sm:$0xff] %v63
  %80 = vst [vmem:[#allocation2 + $0x2d8] sm:$0xff] %v64
  %s81 = sadd.s32 %s12, 256
  %s82 = scalar_lea.vmem %s0, %s81
  %v83 = vld [vmem:[%s82] sm:$0xff]
  %v84 = vld [vmem:[%s82 + $0x8] sm:$0xff]
  %v85 = vld [vmem:[%s82 + $0x10] sm:$0xff]
  %v86 = vld [vmem:[%s82 + $0x18] sm:$0xff]
  %v87 = vld [vmem:[%s82 + $0x20] sm:$0xff]
  %v88 = vld [vmem:[%s82 + $0x28] sm:$0xff]
  %v89 = vld [vmem:[%s82 + $0x30] sm:$0xff]
  %v90 = vld [vmem:[%s82 + $0x38] sm:$0xff]
  %v91 = vld [vmem:[%s82 + $0x40] sm:$0xff]
  %v92 = vld [vmem:[%s82 + $0x48] sm:$0xff]
  %v93 = vld [vmem:[%s82 + $0x50] sm:$0xff]
  %v94 = vld [vmem:[%s82 + $0x58] sm:$0xff]
  %v95 = vld [vmem:[%s82 + $0x60] sm:$0xff]
  %v96 = vld [vmem:[%s82 + $0x68] sm:$0xff]
  %v97 = vld [vmem:[%s82 + $0x70] sm:$0xff]
  %v98 = vld [vmem:[%s82 + $0x78] sm:$0xff]
  %99 = vst [vmem:[#allocation2 + $0x10] sm:$0xff] %v83
  %100 = vst [vmem:[#allocation2 + $0x40] sm:$0xff] %v84
  %101 = vst [vmem:[#allocation2 + $0x70] sm:$0xff] %v85
  %102 = vst [vmem:[#allocation2 + $0xa0] sm:$0xff] %v86
  %103 = vst [vmem:[#allocation2 + $0xd0] sm:$0xff] %v87
  %104 = vst [vmem:[#allocation2 + $0x100] sm:$0xff] %v88
  %105 = vst [vmem:[#allocation2 + $0x130] sm:$0xff] %v89
  %106 = vst [vmem:[#allocation2 + $0x160] sm:$0xff] %v90
  %107 = vst [vmem:[#allocation2 + $0x190] sm:$0xff] %v91
  %108 = vst [vmem:[#allocation2 + $0x1c0] sm:$0xff] %v92
  %109 = vst [vmem:[#allocation2 + $0x1f0] sm:$0xff] %v93
  %110 = vst [vmem:[#allocation2 + $0x220] sm:$0xff] %v94
  %111 = vst [vmem:[#allocation2 + $0x250] sm:$0xff] %v95
  %112 = vst [vmem:[#allocation2 + $0x280] sm:$0xff] %v96
  %113 = vst [vmem:[#allocation2 + $0x2b0] sm:$0xff] %v97
  %114 = vst [vmem:[#allocation2 + $0x2e0] sm:$0xff] %v98
  %s115 = sadd.s32 %s12, 384
  %s116 = scalar_lea.vmem %s0, %s115
  %v117 = vld [vmem:[%s116] sm:$0xff]
  %v118 = vld [vmem:[%s116 + $0x8] sm:$0xff]
  %v119 = vld [vmem:[%s116 + $0x10] sm:$0xff]
  %v120 = vld [vmem:[%s116 + $0x18] sm:$0xff]
  %v121 = vld [vmem:[%s116 + $0x20] sm:$0xff]
  %v122 = vld [vmem:[%s116 + $0x28] sm:$0xff]
  %v123 = vld [vmem:[%s116 + $0x30] sm:$0xff]
  %v124 = vld [vmem:[%s116 + $0x38] sm:$0xff]
  %v125 = vld [vmem:[%s116 + $0x40] sm:$0xff]
  %v126 = vld [vmem:[%s116 + $0x48] sm:$0xff]
  %v127 = vld [vmem:[%s116 + $0x50] sm:$0xff]
  %v128 = vld [vmem:[%s116 + $0x58] sm:$0xff]
  %v129 = vld [vmem:[%s116 + $0x60] sm:$0xff]
  %v130 = vld [vmem:[%s116 + $0x68] sm:$0xff]
  %v131 = vld [vmem:[%s116 + $0x70] sm:$0xff]
  %v132 = vld [vmem:[%s116 + $0x78] sm:$0xff]
  %133 = vst [vmem:[#allocation2 + $0x18] sm:$0xff] %v117
  %134 = vst [vmem:[#allocation2 + $0x48] sm:$0xff] %v118
  %135 = vst [vmem:[#allocation2 + $0x78] sm:$0xff] %v119
  %136 = vst [vmem:[#allocation2 + $0xa8] sm:$0xff] %v120
  %137 = vst [vmem:[#allocation2 + $0xd8] sm:$0xff] %v121
  %138 = vst [vmem:[#allocation2 + $0x108] sm:$0xff] %v122
  %139 = vst [vmem:[#allocation2 + $0x138] sm:$0xff] %v123
  %140 = vst [vmem:[#allocation2 + $0x168] sm:$0xff] %v124
  %141 = vst [vmem:[#allocation2 + $0x198] sm:$0xff] %v125
  %142 = vst [vmem:[#allocation2 + $0x1c8] sm:$0xff] %v126
  %143 = vst [vmem:[#allocation2 + $0x1f8] sm:$0xff] %v127
  %144 = vst [vmem:[#allocation2 + $0x228] sm:$0xff] %v128
  %145 = vst [vmem:[#allocation2 + $0x258] sm:$0xff] %v129
  %146 = vst [vmem:[#allocation2 + $0x288] sm:$0xff] %v130
  %147 = vst [vmem:[#allocation2 + $0x2b8] sm:$0xff] %v131
  %148 = vst [vmem:[#allocation2 + $0x2e8] sm:$0xff] %v132
  %s149 = sadd.s32 %s12, 512
  %s150 = scalar_lea.vmem %s0, %s149
  %v151 = vld [vmem:[%s150] sm:$0xff]
  %v152 = vld [vmem:[%s150 + $0x8] sm:$0xff]
  %v153 = vld [vmem:[%s150 + $0x10] sm:$0xff]
  %v154 = vld [vmem:[%s150 + $0x18] sm:$0xff]
  %v155 = vld [vmem:[%s150 + $0x20] sm:$0xff]
  %v156 = vld [vmem:[%s150 + $0x28] sm:$0xff]
  %v157 = vld [vmem:[%s150 + $0x30] sm:$0xff]
  %v158 = vld [vmem:[%s150 + $0x38] sm:$0xff]
  %v159 = vld [vmem:[%s150 + $0x40] sm:$0xff]
  %v160 = vld [vmem:[%s150 + $0x48] sm:$0xff]
  %v161 = vld [vmem:[%s150 + $0x50] sm:$0xff]
  %v162 = vld [vmem:[%s150 + $0x58] sm:$0xff]
  %v163 = vld [vmem:[%s150 + $0x60] sm:$0xff]
  %v164 = vld [vmem:[%s150 + $0x68] sm:$0xff]
  %v165 = vld [vmem:[%s150 + $0x70] sm:$0xff]
  %v166 = vld [vmem:[%s150 + $0x78] sm:$0xff]
  %167 = vst [vmem:[#allocation2 + $0x20] sm:$0xff] %v151
  %168 = vst [vmem:[#allocation2 + $0x50] sm:$0xff] %v152
  %169 = vst [vmem:[#allocation2 + $0x80] sm:$0xff] %v153
  %170 = vst [vmem:[#allocation2 + $0xb0] sm:$0xff] %v154
  %171 = vst [vmem:[#allocation2 + $0xe0] sm:$0xff] %v155
  %172 = vst [vmem:[#allocation2 + $0x110] sm:$0xff] %v156
  %173 = vst [vmem:[#allocation2 + $0x140] sm:$0xff] %v157
  %174 = vst [vmem:[#allocation2 + $0x170] sm:$0xff] %v158
  %175 = vst [vmem:[#allocation2 + $0x1a0] sm:$0xff] %v159
  %176 = vst [vmem:[#allocation2 + $0x1d0] sm:$0xff] %v160
  %177 = vst [vmem:[#allocation2 + $0x200] sm:$0xff] %v161
  %178 = vst [vmem:[#allocation2 + $0x230] sm:$0xff] %v162
  %179 = vst [vmem:[#allocation2 + $0x260] sm:$0xff] %v163
  %180 = vst [vmem:[#allocation2 + $0x290] sm:$0xff] %v164
  %181 = vst [vmem:[#allocation2 + $0x2c0] sm:$0xff] %v165
  %182 = vst [vmem:[#allocation2 + $0x2f0] sm:$0xff] %v166
  %s183 = sadd.s32 %s12, 640
  %s184 = scalar_lea.vmem %s0, %s183
  %v185 = vld [vmem:[%s184] sm:$0xff]
  %v186 = vld [vmem:[%s184 + $0x8] sm:$0xff]
  %v187 = vld [vmem:[%s184 + $0x10] sm:$0xff]
  %v188 = vld [vmem:[%s184 + $0x18] sm:$0xff]
  %v189 = vld [vmem:[%s184 + $0x20] sm:$0xff]
  %v190 = vld [vmem:[%s184 + $0x28] sm:$0xff]
  %v191 = vld [vmem:[%s184 + $0x30] sm:$0xff]
  %v192 = vld [vmem:[%s184 + $0x38] sm:$0xff]
  %v193 = vld [vmem:[%s184 + $0x40] sm:$0xff]
  %v194 = vld [vmem:[%s184 + $0x48] sm:$0xff]
  %v195 = vld [vmem:[%s184 + $0x50] sm:$0xff]
  %v196 = vld [vmem:[%s184 + $0x58] sm:$0xff]
  %v197 = vld [vmem:[%s184 + $0x60] sm:$0xff]
  %v198 = vld [vmem:[%s184 + $0x68] sm:$0xff]
  %v199 = vld [vmem:[%s184 + $0x70] sm:$0xff]
  %v200 = vld [vmem:[%s184 + $0x78] sm:$0xff]
  %201 = vst [vmem:[#allocation2 + $0x28] sm:$0xff] %v185
  %202 = vst [vmem:[#allocation2 + $0x58] sm:$0xff] %v186
  %203 = vst [vmem:[#allocation2 + $0x88] sm:$0xff] %v187
  %204 = vst [vmem:[#allocation2 + $0xb8] sm:$0xff] %v188
  %205 = vst [vmem:[#allocation2 + $0xe8] sm:$0xff] %v189
  %206 = vst [vmem:[#allocation2 + $0x118] sm:$0xff] %v190
  %207 = vst [vmem:[#allocation2 + $0x148] sm:$0xff] %v191
  %208 = vst [vmem:[#allocation2 + $0x178] sm:$0xff] %v192
  %209 = vst [vmem:[#allocation2 + $0x1a8] sm:$0xff] %v193
  %210 = vst [vmem:[#allocation2 + $0x1d8] sm:$0xff] %v194
  %211 = vst [vmem:[#allocation2 + $0x208] sm:$0xff] %v195
  %212 = vst [vmem:[#allocation2 + $0x238] sm:$0xff] %v196
  %213 = vst [vmem:[#allocation2 + $0x268] sm:$0xff] %v197
  %214 = vst [vmem:[#allocation2 + $0x298] sm:$0xff] %v198
  %215 = vst [vmem:[#allocation2 + $0x2c8] sm:$0xff] %v199
  %216 = vst [vmem:[#allocation2 + $0x2f8] sm:$0xff] %v200
  %v217 = vld [vmem:[%s1] sm:$0xff]
  %v218 = vld [vmem:[%s1 + $0x8] sm:$0xff]
  %v219 = vld [vmem:[%s1 + $0x10] sm:$0xff]
  %v220 = vld [vmem:[%s1 + $0x18] sm:$0xff]
  %v221 = vld [vmem:[#allocation2] sm:$0xff]
  %v222 = vld [vmem:[#allocation2 + $0x8] sm:$0xff]
  %v223 = vld [vmem:[#allocation2 + $0x10] sm:$0xff]
  %v224 = vld [vmem:[#allocation2 + $0x18] sm:$0xff]
  %v225 = vld [vmem:[#allocation2 + $0x20] sm:$0xff]
  %v226 = vld [vmem:[#allocation2 + $0x28] sm:$0xff]
  %v227 = vld [vmem:[#allocation2 + $0x30] sm:$0xff]
  %v228 = vld [vmem:[#allocation2 + $0x38] sm:$0xff]
  %v229 = vld [vmem:[#allocation2 + $0x40] sm:$0xff]
  %v230 = vld [vmem:[#allocation2 + $0x48] sm:$0xff]
  %v231 = vld [vmem:[#allocation2 + $0x50] sm:$0xff]
  %v232 = vld [vmem:[#allocation2 + $0x58] sm:$0xff]
  %v233 = vld [vmem:[#allocation2 + $0x60] sm:$0xff]
  %v234 = vld [vmem:[#allocation2 + $0x68] sm:$0xff]
  %v235 = vld [vmem:[#allocation2 + $0x70] sm:$0xff]
  %v236 = vld [vmem:[#allocation2 + $0x78] sm:$0xff]
  %v237 = vld [vmem:[#allocation2 + $0x80] sm:$0xff]
  %v238 = vld [vmem:[#allocation2 + $0x88] sm:$0xff]
  %v239 = vld [vmem:[#allocation2 + $0x90] sm:$0xff]
  %v240 = vld [vmem:[#allocation2 + $0x98] sm:$0xff]
  %v241 = vld [vmem:[#allocation2 + $0xa0] sm:$0xff]
  %v242 = vld [vmem:[#allocation2 + $0xa8] sm:$0xff]
  %v243 = vld [vmem:[#allocation2 + $0xb0] sm:$0xff]
  %v244 = vld [vmem:[#allocation2 + $0xb8] sm:$0xff]
  %v245 = vld [vmem:[#allocation2 + $0xc0] sm:$0xff]
  %v246 = vld [vmem:[#allocation2 + $0xc8] sm:$0xff]
  %v247 = vld [vmem:[#allocation2 + $0xd0] sm:$0xff]
  %v248 = vld [vmem:[#allocation2 + $0xd8] sm:$0xff]
  %v249 = vld [vmem:[#allocation2 + $0xe0] sm:$0xff]
  %v250 = vld [vmem:[#allocation2 + $0xe8] sm:$0xff]
  %v251 = vld [vmem:[#allocation2 + $0xf0] sm:$0xff]
  %v252 = vld [vmem:[#allocation2 + $0xf8] sm:$0xff]
  %v253 = vld [vmem:[#allocation2 + $0x100] sm:$0xff]
  %v254 = vld [vmem:[#allocation2 + $0x108] sm:$0xff]
  %v255 = vld [vmem:[#allocation2 + $0x110] sm:$0xff]
  %v256 = vld [vmem:[#allocation2 + $0x118] sm:$0xff]
  %v257 = vld [vmem:[#allocation2 + $0x120] sm:$0xff]
  %v258 = vld [vmem:[#allocation2 + $0x128] sm:$0xff]
  %v259 = vld [vmem:[#allocation2 + $0x130] sm:$0xff]
  %v260 = vld [vmem:[#allocation2 + $0x138] sm:$0xff]
  %v261 = vld [vmem:[#allocation2 + $0x140] sm:$0xff]
  %v262 = vld [vmem:[#allocation2 + $0x148] sm:$0xff]
  %v263 = vld [vmem:[#allocation2 + $0x150] sm:$0xff]
  %v264 = vld [vmem:[#allocation2 + $0x158] sm:$0xff]
  %v265 = vld [vmem:[#allocation2 + $0x160] sm:$0xff]
  %v266 = vld [vmem:[#allocation2 + $0x168] sm:$0xff]
  %v267 = vld [vmem:[#allocation2 + $0x170] sm:$0xff]
  %v268 = vld [vmem:[#allocation2 + $0x178] sm:$0xff]
  %v269 = vld [vmem:[#allocation2 + $0x180] sm:$0xff]
  %v270 = vld [vmem:[#allocation2 + $0x188] sm:$0xff]
  %v271 = vld [vmem:[#allocation2 + $0x190] sm:$0xff]
  %v272 = vld [vmem:[#allocation2 + $0x198] sm:$0xff]
  %v273 = vld [vmem:[#allocation2 + $0x1a0] sm:$0xff]
  %v274 = vld [vmem:[#allocation2 + $0x1a8] sm:$0xff]
  %v275 = vld [vmem:[#allocation2 + $0x1b0] sm:$0xff]
  %v276 = vld [vmem:[#allocation2 + $0x1b8] sm:$0xff]
  %v277 = vld [vmem:[#allocation2 + $0x1c0] sm:$0xff]
  %v278 = vld [vmem:[#allocation2 + $0x1c8] sm:$0xff]
  %v279 = vld [vmem:[#allocation2 + $0x1d0] sm:$0xff]
  %v280 = vld [vmem:[#allocation2 + $0x1d8] sm:$0xff]
  %v281 = vld [vmem:[#allocation2 + $0x1e0] sm:$0xff]
  %v282 = vld [vmem:[#allocation2 + $0x1e8] sm:$0xff]
  %v283 = vld [vmem:[#allocation2 + $0x1f0] sm:$0xff]
  %v284 = vld [vmem:[#allocation2 + $0x1f8] sm:$0xff]
  %v285 = vld [vmem:[#allocation2 + $0x200] sm:$0xff]
  %v286 = vld [vmem:[#allocation2 + $0x208] sm:$0xff]
  %v287 = vld [vmem:[#allocation2 + $0x210] sm:$0xff]
  %v288 = vld [vmem:[#allocation2 + $0x218] sm:$0xff]
  %v289 = vld [vmem:[#allocation2 + $0x220] sm:$0xff]
  %v290 = vld [vmem:[#allocation2 + $0x228] sm:$0xff]
  %v291 = vld [vmem:[#allocation2 + $0x230] sm:$0xff]
  %v292 = vld [vmem:[#allocation2 + $0x238] sm:$0xff]
  %v293 = vld [vmem:[#allocation2 + $0x240] sm:$0xff]
  %v294 = vld [vmem:[#allocation2 + $0x248] sm:$0xff]
  %v295 = vld [vmem:[#allocation2 + $0x250] sm:$0xff]
  %v296 = vld [vmem:[#allocation2 + $0x258] sm:$0xff]
  %v297 = vld [vmem:[#allocation2 + $0x260] sm:$0xff]
  %v298 = vld [vmem:[#allocation2 + $0x268] sm:$0xff]
  %v299 = vld [vmem:[#allocation2 + $0x270] sm:$0xff]
  %v300 = vld [vmem:[#allocation2 + $0x278] sm:$0xff]
  %v301 = vld [vmem:[#allocation2 + $0x280] sm:$0xff]
  %v302 = vld [vmem:[#allocation2 + $0x288] sm:$0xff]
  %v303 = vld [vmem:[#allocation2 + $0x290] sm:$0xff]
  %v304 = vld [vmem:[#allocation2 + $0x298] sm:$0xff]
  %v305 = vld [vmem:[#allocation2 + $0x2a0] sm:$0xff]
  %v306 = vld [vmem:[#allocation2 + $0x2a8] sm:$0xff]
  %v307 = vld [vmem:[#allocation2 + $0x2b0] sm:$0xff]
  %v308 = vld [vmem:[#allocation2 + $0x2b8] sm:$0xff]
  %v309 = vld [vmem:[#allocation2 + $0x2c0] sm:$0xff]
  %v310 = vld [vmem:[#allocation2 + $0x2c8] sm:$0xff]
  %v311 = vld [vmem:[#allocation2 + $0x2d0] sm:$0xff]
  %v312 = vld [vmem:[#allocation2 + $0x2d8] sm:$0xff]
  %v313 = vld [vmem:[#allocation2 + $0x2e0] sm:$0xff]
  %v314 = vld [vmem:[#allocation2 + $0x2e8] sm:$0xff]
  %v315 = vld [vmem:[#allocation2 + $0x2f0] sm:$0xff]
  %v316 = vld [vmem:[#allocation2 + $0x2f8] sm:$0xff]
  %317 = vmatprep.subr.mxu0 %v222
  %318 = vmatpush1.msra.mxu0 %v221
  %319 = vmatprep.subr.mxu0 %v228
  %320 = vmatpush1.msra.mxu0 %v227
  %321 = vmatprep.subr.mxu0 %v234
  %322 = vmatpush1.msra.mxu0 %v233
  %323 = vmatprep.subr.mxu0 %v240
  %324 = vmatpush1.msra.mxu0 %v239
  %325 = vmatprep.subr.mxu0 %v246
  %326 = vmatpush1.msra.mxu0 %v245
  %327 = vmatprep.subr.mxu0 %v252
  %328 = vmatpush1.msra.mxu0 %v251
  %329 = vmatprep.subr.mxu0 %v258
  %330 = vmatpush1.msra.mxu0 %v257
  %331 = vmatprep.subr.mxu0 %v264
  %332 = vmatpush1.msra.mxu0 %v263
  %333 = vmatprep.subr.mxu0 %v270
  %334 = vmatpush1.msra.mxu0 %v269
  %335 = vmatprep.subr.mxu0 %v276
  %336 = vmatpush1.msra.mxu0 %v275
  %337 = vmatprep.subr.mxu0 %v282
  %338 = vmatpush1.msra.mxu0 %v281
  %339 = vmatprep.subr.mxu0 %v288
  %340 = vmatpush1.msra.mxu0 %v287
  %341 = vmatprep.subr.mxu0 %v294
  %342 = vmatpush1.msra.mxu0 %v293
  %343 = vmatprep.subr.mxu0 %v300
  %344 = vmatpush1.msra.mxu0 %v299
  %345 = vmatprep.subr.mxu0 %v306
  %346 = vmatpush1.msra.mxu0 %v305
  %347 = vmatprep.subr.mxu0 %v312
  %348 = vmatpush1.msra.mxu0 %v311
  %349 = vmatprep.subr.mxu0 0.0
  %350 = vmatpush1.msra.mxu0 0.0
  %351 = vmatprep.subr.mxu0 0.0
  %352 = vmatpush1.msra.mxu0 0.0
  %353 = vmatprep.subr.mxu0 0.0
  %354 = vmatpush1.msra.mxu0 0.0
  %355 = vmatprep.subr.mxu0 0.0
  %356 = vmatpush1.msra.mxu0 0.0
  %357 = vmatprep.subr.mxu0 0.0
  %358 = vmatpush1.msra.mxu0 0.0
  %359 = vmatprep.subr.mxu0 0.0
  %360 = vmatpush1.msra.mxu0 0.0
  %361 = vmatprep.subr.mxu0 0.0
  %362 = vmatpush1.msra.mxu0 0.0
  %363 = vmatprep.subr.mxu0 0.0
  %364 = vmatpush1.msra.mxu0 0.0
  %365 = vmatprep.subr.mxu0 0.0
  %366 = vmatpush1.msra.mxu0 0.0
  %367 = vmatprep.subr.mxu0 0.0
  %368 = vmatpush1.msra.mxu0 0.0
  %369 = vmatprep.subr.mxu0 0.0
  %370 = vmatpush1.msra.mxu0 0.0
  %371 = vmatprep.subr.mxu0 0.0
  %372 = vmatpush1.msra.mxu0 0.0
  %373 = vmatprep.subr.mxu0 0.0
  %374 = vmatpush1.msra.mxu0 0.0
  %375 = vmatprep.subr.mxu0 0.0
  %376 = vmatpush1.msra.mxu0 0.0
  %377 = vmatprep.subr.mxu0 0.0
  %378 = vmatpush1.msra.mxu0 0.0
  %379 = vmatprep.subr.mxu0 0.0
  %380 = vmatpush1.msra.mxu0 0.0
  %381 = vmatprep.mubr.f32.mxu0 0.0
  %382 = vmatmul.mubr.f32.gmra.mrb[0].mxu0 %v217
  %v383 = vpop.f32.mrb[0].mxu0
  %v384 = vadd.f32 0.0, %v383
  %v385 = vpop.f32.mrb[0].mxu0
  %v386 = vadd.f32 0.0, %v385
  %387 = vmatprep.mubr.f32.mxu0 0.0
  %388 = vmatmul.mubr.f32.gmra.mrb[0].mxu0 %v218
  %v389 = vpop.f32.mrb[0].mxu0
  %v390 = vadd.f32 0.0, %v389
  %v391 = vpop.f32.mrb[0].mxu0
  %v392 = vadd.f32 0.0, %v391
  %393 = vmatprep.mubr.f32.mxu0 0.0
  %394 = vmatmul.mubr.f32.gmra.mrb[0].mxu0 %v219
  %v395 = vpop.f32.mrb[0].mxu0
  %v396 = vadd.f32 0.0, %v395
  %v397 = vpop.f32.mrb[0].mxu0
  %v398 = vadd.f32 0.0, %v397
  %399 = vmatprep.mubr.f32.mxu0 0.0
  %400 = vmatmul.mubr.f32.gmra.mrb[0].mxu0 %v220
  %v401 = vpop.f32.mrb[0].mxu0
  %v402 = vadd.f32 0.0, %v401
  %v403 = vpop.f32.mrb[0].mxu0
  %v404 = vadd.f32 0.0, %v403
  %405 = vdwg.mxu0
  %406 = vmatprep.subr.mxu0 %v224
  %407 = vmatpush1.msra.mxu0 %v223
  %408 = vmatprep.subr.mxu0 %v230
  %409 = vmatpush1.msra.mxu0 %v229
  %410 = vmatprep.subr.mxu0 %v236
  %411 = vmatpush1.msra.mxu0 %v235
  %412 = vmatprep.subr.mxu0 %v242
  %413 = vmatpush1.msra.mxu0 %v241
  %414 = vmatprep.subr.mxu0 %v248
  %415 = vmatpush1.msra.mxu0 %v247
  %416 = vmatprep.subr.mxu0 %v254
  %417 = vmatpush1.msra.mxu0 %v253
  %418 = vmatprep.subr.mxu0 %v260
  %419 = vmatpush1.msra.mxu0 %v259
  %420 = vmatprep.subr.mxu0 %v266
  %421 = vmatpush1.msra.mxu0 %v265
  %422 = vmatprep.subr.mxu0 %v272
  %423 = vmatpush1.msra.mxu0 %v271
  %424 = vmatprep.subr.mxu0 %v278
  %425 = vmatpush1.msra.mxu0 %v277
  %426 = vmatprep.subr.mxu0 %v284
  %427 = vmatpush1.msra.mxu0 %v283
  %428 = vmatprep.subr.mxu0 %v290
  %429 = vmatpush1.msra.mxu0 %v289
  %430 = vmatprep.subr.mxu0 %v296
  %431 = vmatpush1.msra.mxu0 %v295
  %432 = vmatprep.subr.mxu0 %v302
  %433 = vmatpush1.msra.mxu0 %v301
  %434 = vmatprep.subr.mxu0 %v308
  %435 = vmatpush1.msra.mxu0 %v307
  %436 = vmatprep.subr.mxu0 %v314
  %437 = vmatpush1.msra.mxu0 %v313
  %438 = vmatprep.subr.mxu0 0.0
  %439 = vmatpush1.msra.mxu0 0.0
  %440 = vmatprep.subr.mxu0 0.0
  %441 = vmatpush1.msra.mxu0 0.0
  %442 = vmatprep.subr.mxu0 0.0
  %443 = vmatpush1.msra.mxu0 0.0
  %444 = vmatprep.subr.mxu0 0.0
  %445 = vmatpush1.msra.mxu0 0.0
  %446 = vmatprep.subr.mxu0 0.0
  %447 = vmatpush1.msra.mxu0 0.0
  %448 = vmatprep.subr.mxu0 0.0
  %449 = vmatpush1.msra.mxu0 0.0
  %450 = vmatprep.subr.mxu0 0.0
  %451 = vmatpush1.msra.mxu0 0.0
  %452 = vmatprep.subr.mxu0 0.0
  %453 = vmatpush1.msra.mxu0 0.0
  %454 = vmatprep.subr.mxu0 0.0
  %455 = vmatpush1.msra.mxu0 0.0
  %456 = vmatprep.subr.mxu0 0.0
  %457 = vmatpush1.msra.mxu0 0.0
  %458 = vmatprep.subr.mxu0 0.0
  %459 = vmatpush1.msra.mxu0 0.0
  %460 = vmatprep.subr.mxu0 0.0
  %461 = vmatpush1.msra.mxu0 0.0
  %462 = vmatprep.subr.mxu0 0.0
  %463 = vmatpush1.msra.mxu0 0.0
  %464 = vmatprep.subr.mxu0 0.0
  %465 = vmatpush1.msra.mxu0 0.0
  %466 = vmatprep.subr.mxu0 0.0
  %467 = vmatpush1.msra.mxu0 0.0
  %468 = vmatprep.subr.mxu0 0.0
  %469 = vmatpush1.msra.mxu0 0.0
  %470 = vmatprep.mubr.f32.mxu0 0.0
  %471 = vmatmul.mubr.f32.gmra.mrb[0].mxu0 %v217
  %v472 = vpop.f32.mrb[0].mxu0
  %v473 = vadd.f32 0.0, %v472
  %v474 = vpop.f32.mrb[0].mxu0
  %v475 = vadd.f32 0.0, %v474
  %476 = vmatprep.mubr.f32.mxu0 0.0
  %477 = vmatmul.mubr.f32.gmra.mrb[0].mxu0 %v218
  %v478 = vpop.f32.mrb[0].mxu0
  %v479 = vadd.f32 0.0, %v478
  %v480 = vpop.f32.mrb[0].mxu0
  %v481 = vadd.f32 0.0, %v480
  %482 = vmatprep.mubr.f32.mxu0 0.0
  %483 = vmatmul.mubr.f32.gmra.mrb[0].mxu0 %v219
  %v484 = vpop.f32.mrb[0].mxu0
  %v485 = vadd.f32 0.0, %v484
  %v486 = vpop.f32.mrb[0].mxu0
  %v487 = vadd.f32 0.0, %v486
  %488 = vmatprep.mubr.f32.mxu0 0.0
  %489 = vmatmul.mubr.f32.gmra.mrb[0].mxu0 %v220
  %v490 = vpop.f32.mrb[0].mxu0
  %v491 = vadd.f32 0.0, %v490
  %v492 = vpop.f32.mrb[0].mxu0
  %v493 = vadd.f32 0.0, %v492
  %494 = vdwg.mxu0
  %495 = vmatprep.subr.mxu0 %v226
  %496 = vmatpush1.msra.mxu0 %v225
  %497 = vmatprep.subr.mxu0 %v232
  %498 = vmatpush1.msra.mxu0 %v231
  %499 = vmatprep.subr.mxu0 %v238
  %500 = vmatpush1.msra.mxu0 %v237
  %501 = vmatprep.subr.mxu0 %v244
  %502 = vmatpush1.msra.mxu0 %v243
  %503 = vmatprep.subr.mxu0 %v250
  %504 = vmatpush1.msra.mxu0 %v249
  %505 = vmatprep.subr.mxu0 %v256
  %506 = vmatpush1.msra.mxu0 %v255
  %507 = vmatprep.subr.mxu0 %v262
  %508 = vmatpush1.msra.mxu0 %v261
  %509 = vmatprep.subr.mxu0 %v268
  %510 = vmatpush1.msra.mxu0 %v267
  %511 = vmatprep.subr.mxu0 %v274
  %512 = vmatpush1.msra.mxu0 %v273
  %513 = vmatprep.subr.mxu0 %v280
  %514 = vmatpush1.msra.mxu0 %v279
  %515 = vmatprep.subr.mxu0 %v286
  %516 = vmatpush1.msra.mxu0 %v285
  %517 = vmatprep.subr.mxu0 %v292
  %518 = vmatpush1.msra.mxu0 %v291
  %519 = vmatprep.subr.mxu0 %v298
  %520 = vmatpush1.msra.mxu0 %v297
  %521 = vmatprep.subr.mxu0 %v304
  %522 = vmatpush1.msra.mxu0 %v303
  %523 = vmatprep.subr.mxu0 %v310
  %524 = vmatpush1.msra.mxu0 %v309
  %525 = vmatprep.subr.mxu0 %v316
  %526 = vmatpush1.msra.mxu0 %v315
  %527 = vmatprep.subr.mxu0 0.0
  %528 = vmatpush1.msra.mxu0 0.0
  %529 = vmatprep.subr.mxu0 0.0
  %530 = vmatpush1.msra.mxu0 0.0
  %531 = vmatprep.subr.mxu0 0.0
  %532 = vmatpush1.msra.mxu0 0.0
  %533 = vmatprep.subr.mxu0 0.0
  %534 = vmatpush1.msra.mxu0 0.0
  %535 = vmatprep.subr.mxu0 0.0
  %536 = vmatpush1.msra.mxu0 0.0
  %537 = vmatprep.subr.mxu0 0.0
  %538 = vmatpush1.msra.mxu0 0.0
  %539 = vmatprep.subr.mxu0 0.0
  %540 = vmatpush1.msra.mxu0 0.0
  %541 = vmatprep.subr.mxu0 0.0
  %542 = vmatpush1.msra.mxu0 0.0
  %543 = vmatprep.subr.mxu0 0.0
  %544 = vmatpush1.msra.mxu0 0.0
  %545 = vmatprep.subr.mxu0 0.0
  %546 = vmatpush1.msra.mxu0 0.0
  %547 = vmatprep.subr.mxu0 0.0
  %548 = vmatpush1.msra.mxu0 0.0
  %549 = vmatprep.subr.mxu0 0.0
  %550 = vmatpush1.msra.mxu0 0.0
  %551 = vmatprep.subr.mxu0 0.0
  %552 = vmatpush1.msra.mxu0 0.0
  %553 = vmatprep.subr.mxu0 0.0
  %554 = vmatpush1.msra.mxu0 0.0
  %555 = vmatprep.subr.mxu0 0.0
  %556 = vmatpush1.msra.mxu0 0.0
  %557 = vmatprep.subr.mxu0 0.0
  %558 = vmatpush1.msra.mxu0 0.0
  %559 = vmatprep.mubr.f32.mxu0 0.0
  %560 = vmatmul.mubr.f32.gmra.mrb[0].mxu0 %v217
  %v561 = vpop.f32.mrb[0].mxu0
  %v562 = vadd.f32 0.0, %v561
  %v563 = vpop.f32.mrb[0].mxu0
  %v564 = vadd.f32 0.0, %v563
  %565 = vmatprep.mubr.f32.mxu0 0.0
  %566 = vmatmul.mubr.f32.gmra.mrb[0].mxu0 %v218
  %v567 = vpop.f32.mrb[0].mxu0
  %v568 = vadd.f32 0.0, %v567
  %v569 = vpop.f32.mrb[0].mxu0
  %v570 = vadd.f32 0.0, %v569
  %571 = vmatprep.mubr.f32.mxu0 0.0
  %572 = vmatmul.mubr.f32.gmra.mrb[0].mxu0 %v219
  %v573 = vpop.f32.mrb[0].mxu0
  %v574 = vadd.f32 0.0, %v573
  %v575 = vpop.f32.mrb[0].mxu0
  %v576 = vadd.f32 0.0, %v575
  %577 = vmatprep.mubr.f32.mxu0 0.0
  %578 = vmatmul.mubr.f32.gmra.mrb[0].mxu0 %v220
  %v579 = vpop.f32.mrb[0].mxu0
  %v580 = vadd.f32 0.0, %v579
  %v581 = vpop.f32.mrb[0].mxu0
  %v582 = vadd.f32 0.0, %v581
  %583 = vdwg.mxu0
  %584 = vst [vmem:[#allocation3] sm:$0xff] %v384
  %585 = vst [vmem:[#allocation3 + $0x8] sm:$0xff] %v386
  %586 = vst [vmem:[#allocation3 + $0x10] sm:$0xff] %v473
  %587 = vst [vmem:[#allocation3 + $0x18] sm:$0xff] %v475
  %588 = vst [vmem:[#allocation3 + $0x20] sm:$0xff] %v562
  %589 = vst [vmem:[#allocation3 + $0x28] sm:$0xff] %v564
  %590 = vst [vmem:[#allocation3 + $0x30] sm:$0xff] %v390
  %591 = vst [vmem:[#allocation3 + $0x38] sm:$0xff] %v392
  %592 = vst [vmem:[#allocation3 + $0x40] sm:$0xff] %v479
  %593 = vst [vmem:[#allocation3 + $0x48] sm:$0xff] %v481
  %594 = vst [vmem:[#allocation3 + $0x50] sm:$0xff] %v568
  %595 = vst [vmem:[#allocation3 + $0x58] sm:$0xff] %v570
  %596 = vst [vmem:[#allocation3 + $0x60] sm:$0xff] %v396
  %597 = vst [vmem:[#allocation3 + $0x68] sm:$0xff] %v398
  %598 = vst [vmem:[#allocation3 + $0x70] sm:$0xff] %v485
  %599 = vst [vmem:[#allocation3 + $0x78] sm:$0xff] %v487
  %600 = vst [vmem:[#allocation3 + $0x80] sm:$0xff] %v574
  %601 = vst [vmem:[#allocation3 + $0x88] sm:$0xff] %v576
  %602 = vst [vmem:[#allocation3 + $0x90] sm:$0xff] %v402
  %603 = vst [vmem:[#allocation3 + $0x98] sm:$0xff] %v404
  %604 = vst [vmem:[#allocation3 + $0xa0] sm:$0xff] %v491
  %605 = vst [vmem:[#allocation3 + $0xa8] sm:$0xff] %v493
  %606 = vst [vmem:[#allocation3 + $0xb0] sm:$0xff] %v580
  %607 = vst [vmem:[#allocation3 + $0xb8] sm:$0xff] %v582
  %v608 = vld [vmem:[#allocation3] sm:$0xff]
  %v609 = vld [vmem:[#allocation3 + $0x30] sm:$0x1f]
  %v610 = vld [vmem:[#allocation3 + $0x60] sm:$0xff]
  %v611 = vld [vmem:[#allocation3 + $0x90] sm:$0x1f]
  %v612 = vmul.f32 %v608, %v608
  %v613 = vmul.f32 %v609, %v609
  %v614 = vmul.f32 %v610, %v610
  %v615 = vmul.f32 %v611, %v611
  %v616 = vadd.f32 %v612, %v614
  %v617 = vadd.f32 %v613, %v615
  %v618 = vrsqrt.pop %v616
  %v619 = vmul.f32 %v616, %v618
  %vm620 = vcmp.eq.f32.partialorder %v616, inf
  %v621 = vsel %vm620, %v616, %v619
  %vm622 = vcmp.eq.f32.partialorder %v616, 0.0
  %v623 = vand.u32 %v616, 2147483648
  %v624 = vsel %vm622, %v623, %v621
  %v625 = vrsqrt.pop %v617
  %v626 = vmul.f32 %v617, %v625
  %vm627 = vcmp.eq.f32.partialorder %v617, inf
  %v628 = vsel %vm627, %v617, %v626
  %vm629 = vcmp.eq.f32.partialorder %v617, 0.0
  %v630 = vand.u32 %v617, 2147483648
  %v631 = vsel %vm629, %v630, %v628
  %632 = vst [vmem:[%s2] sm:$0xff] %v624
  %633 = vst [vmem:[%s2 + $0x8] sm:$0x1f] %v631
  %v634 = vld [vmem:[#allocation3 + $0x8] sm:$0xff]
  %v635 = vld [vmem:[#allocation3 + $0x38] sm:$0x1f]
  %v636 = vld [vmem:[#allocation3 + $0x68] sm:$0xff]
  %v637 = vld [vmem:[#allocation3 + $0x98] sm:$0x1f]
  %v638 = vmul.f32 %v634, %v634
  %v639 = vmul.f32 %v635, %v635
  %v640 = vmul.f32 %v636, %v636
  %v641 = vmul.f32 %v637, %v637
  %v642 = vadd.f32 %v638, %v640
  %v643 = vadd.f32 %v639, %v641
  %v644 = vrsqrt.pop %v642
  %v645 = vmul.f32 %v642, %v644
  %vm646 = vcmp.eq.f32.partialorder %v642, inf
  %v647 = vsel %vm646, %v642, %v645
  %vm648 = vcmp.eq.f32.partialorder %v642, 0.0
  %v649 = vand.u32 %v642, 2147483648
  %v650 = vsel %vm648, %v649, %v647
  %v651 = vrsqrt.pop %v643
  %v652 = vmul.f32 %v643, %v651
  %vm653 = vcmp.eq.f32.partialorder %v643, inf
  %v654 = vsel %vm653, %v643, %v652
  %vm655 = vcmp.eq.f32.partialorder %v643, 0.0
  %v656 = vand.u32 %v643, 2147483648
  %v657 = vsel %vm655, %v656, %v654
  %s658 = scalar_lea.vmem %s2, 16
  %659 = vst [vmem:[%s658] sm:$0xff] %v650
  %660 = vst [vmem:[%s658 + $0x8] sm:$0x1f] %v657
  %v661 = vld [vmem:[#allocation3 + $0x10] sm:$0xff]
  %v662 = vld [vmem:[#allocation3 + $0x40] sm:$0x1f]
  %v663 = vld [vmem:[#allocation3 + $0x70] sm:$0xff]
  %v664 = vld [vmem:[#allocation3 + $0xa0] sm:$0x1f]
  %v665 = vmul.f32 %v661, %v661
  %v666 = vmul.f32 %v662, %v662
  %v667 = vmul.f32 %v663, %v663
  %v668 = vmul.f32 %v664, %v664
  %v669 = vadd.f32 %v665, %v667
  %v670 = vadd.f32 %v666, %v668
  %v671 = vrsqrt.pop %v669
  %v672 = vmul.f32 %v669, %v671
  %vm673 = vcmp.eq.f32.partialorder %v669, inf
  %v674 = vsel %vm673, %v669, %v672
  %vm675 = vcmp.eq.f32.partialorder %v669, 0.0
  %v676 = vand.u32 %v669, 2147483648
  %v677 = vsel %vm675, %v676, %v674
  %v678 = vrsqrt.pop %v670
  %v679 = vmul.f32 %v670, %v678
  %vm680 = vcmp.eq.f32.partialorder %v670, inf
  %v681 = vsel %vm680, %v670, %v679
  %vm682 = vcmp.eq.f32.partialorder %v670, 0.0
  %v683 = vand.u32 %v670, 2147483648
  %v684 = vsel %vm682, %v683, %v681
  %s685 = scalar_lea.vmem %s2, 32
  %686 = vst [vmem:[%s685] sm:$0xff] %v677
  %687 = vst [vmem:[%s685 + $0x8] sm:$0x1f] %v684
  %v688 = vld [vmem:[#allocation3 + $0x18] sm:$0xff]
  %v689 = vld [vmem:[#allocation3 + $0x48] sm:$0x1f]
  %v690 = vld [vmem:[#allocation3 + $0x78] sm:$0xff]
  %v691 = vld [vmem:[#allocation3 + $0xa8] sm:$0x1f]
  %v692 = vmul.f32 %v688, %v688
  %v693 = vmul.f32 %v689, %v689
  %v694 = vmul.f32 %v690, %v690
  %v695 = vmul.f32 %v691, %v691
  %v696 = vadd.f32 %v692, %v694
  %v697 = vadd.f32 %v693, %v695
  %v698 = vrsqrt.pop %v696
  %v699 = vmul.f32 %v696, %v698
  %vm700 = vcmp.eq.f32.partialorder %v696, inf
  %v701 = vsel %vm700, %v696, %v699
  %vm702 = vcmp.eq.f32.partialorder %v696, 0.0
  %v703 = vand.u32 %v696, 2147483648
  %v704 = vsel %vm702, %v703, %v701
  %v705 = vrsqrt.pop %v697
  %v706 = vmul.f32 %v697, %v705
  %vm707 = vcmp.eq.f32.partialorder %v697, inf
  %v708 = vsel %vm707, %v697, %v706
  %vm709 = vcmp.eq.f32.partialorder %v697, 0.0
  %v710 = vand.u32 %v697, 2147483648
  %v711 = vsel %vm709, %v710, %v708
  %s712 = scalar_lea.vmem %s2, 48
  %713 = vst [vmem:[%s712] sm:$0xff] %v704
  %714 = vst [vmem:[%s712 + $0x8] sm:$0x1f] %v711
  %v715 = vld [vmem:[#allocation3 + $0x20] sm:$0xff]
  %v716 = vld [vmem:[#allocation3 + $0x50] sm:$0x1f]
  %v717 = vld [vmem:[#allocation3 + $0x80] sm:$0xff]
  %v718 = vld [vmem:[#allocation3 + $0xb0] sm:$0x1f]
  %v719 = vmul.f32 %v715, %v715
  %v720 = vmul.f32 %v716, %v716
  %v721 = vmul.f32 %v717, %v717
  %v722 = vmul.f32 %v718, %v718
  %v723 = vadd.f32 %v719, %v721
  %v724 = vadd.f32 %v720, %v722
  %v725 = vrsqrt.pop %v723
  %v726 = vmul.f32 %v723, %v725
  %vm727 = vcmp.eq.f32.partialorder %v723, inf
  %v728 = vsel %vm727, %v723, %v726
  %vm729 = vcmp.eq.f32.partialorder %v723, 0.0
  %v730 = vand.u32 %v723, 2147483648
  %v731 = vsel %vm729, %v730, %v728
  %v732 = vrsqrt.pop %v724
  %v733 = vmul.f32 %v724, %v732
  %vm734 = vcmp.eq.f32.partialorder %v724, inf
  %v735 = vsel %vm734, %v724, %v733
  %vm736 = vcmp.eq.f32.partialorder %v724, 0.0
  %v737 = vand.u32 %v724, 2147483648
  %v738 = vsel %vm736, %v737, %v735
  %s739 = scalar_lea.vmem %s2, 64
  %740 = vst [vmem:[%s739] sm:$0xff] %v731
  %741 = vst [vmem:[%s739 + $0x8] sm:$0x1f] %v738
  %v742 = vld [vmem:[#allocation3 + $0x28] sm:$0xff]
  %v743 = vld [vmem:[#allocation3 + $0x58] sm:$0x1f]
  %v744 = vld [vmem:[#allocation3 + $0x88] sm:$0xff]
  %v745 = vld [vmem:[#allocation3 + $0xb8] sm:$0x1f]
  %v746 = vmul.f32 %v742, %v742
  %v747 = vmul.f32 %v743, %v743
  %v748 = vmul.f32 %v744, %v744
  %v749 = vmul.f32 %v745, %v745
  %v750 = vadd.f32 %v746, %v748
  %v751 = vadd.f32 %v747, %v749
  %v752 = vrsqrt.pop %v750
  %v753 = vmul.f32 %v750, %v752
  %vm754 = vcmp.eq.f32.partialorder %v750, inf
  %v755 = vsel %vm754, %v750, %v753
  %vm756 = vcmp.eq.f32.partialorder %v750, 0.0
  %v757 = vand.u32 %v750, 2147483648
  %v758 = vsel %vm756, %v757, %v755
  %v759 = vrsqrt.pop %v751
  %v760 = vmul.f32 %v751, %v759
  %vm761 = vcmp.eq.f32.partialorder %v751, inf
  %v762 = vsel %vm761, %v751, %v760
  %vm763 = vcmp.eq.f32.partialorder %v751, 0.0
  %v764 = vand.u32 %v751, 2147483648
  %v765 = vsel %vm763, %v764, %v762
  %s766 = scalar_lea.vmem %s2, 80
  %767 = vst [vmem:[%s766] sm:$0xff] %v758
  %768 = vst [vmem:[%s766 + $0x8] sm:$0x1f] %v765
  // Predicated region
  $region10: #{cwt_pallas.1} parent=0 // pred_check
    _
  $region11: #{cwt_pallas.1} parent=0 // pred_check_branch
    %770 = sbr.rel (0) target = $region13
  $region12: #{cwt_pallas.1} parent=0 // pred_region
    _
  $region13: #{cwt_pallas.1} parent=0 // pred_fallthru
    _
  // Predicated region
  $region14: #{cwt_pallas.1} parent=0 // pred_check
    _
  $region15: #{cwt_pallas.1} parent=0 // pred_check_branch
    %772 = sbr.rel (0) target = $region17
  $region16: #{cwt_pallas.1} parent=0 // pred_region
    _
  $region17: #{cwt_pallas.1} parent=0 // pred_fallthru
    _

</llo_original>
